<compile_context>
chip_gen: v7x
topology: tpu7x:2x2x1
jax: 0.10.0
libtpu: 0.0.40
codegen_flags: <defaults>
</compile_context>

<pallas_src>
import jax
import jax.numpy as jnp
from jax.experimental import pallas as pl
from jax.experimental.pallas import tpu as pltpu


def _round_up(x, m):
    return (x + m - 1) // m * m


def _policy_kernel(x_ref, w1_ref, b1_ref, w2_ref, b2_ref, w3_ref, b3_ref,
                   out_ref):
    # One batch tile per grid step; the whole 3-layer MLP is fused.
    x = x_ref[...]                                         # (TILE_B, Din) f32

    # Layer 1: Linear + ReLU
    h1 = jnp.dot(x, w1_ref[...], preferred_element_type=jnp.float32)
    h1 = jnp.maximum(h1 + b1_ref[...], 0.0)

    # Layer 2: Linear + ReLU
    h2 = jnp.dot(h1, w2_ref[...], preferred_element_type=jnp.float32)
    h2 = jnp.maximum(h2 + b2_ref[...], 0.0)

    # Layer 3: Linear (no activation); cast only at the final store (bf16 out)
    y = jnp.dot(h2, w3_ref[...], preferred_element_type=jnp.float32)
    out_ref[...] = (y + b3_ref[...]).astype(out_ref.dtype)


def policy_network_forward(state, params, *, tile_cap=2048,
                           out_dtype=jnp.bfloat16):
    """state: (B, input_dim) float32.
    params: dict w1,b1,w2,b2,w3,b3 with weights pre-transposed to (in, out)
    and biases either 1-D (n,) or (1, n).
    Returns (B, out_dim) in `out_dtype` (bfloat16 by default)."""
    B, input_dim = state.shape
    hl_dim = params["w1"].shape[1]
    out_dim = params["w3"].shape[1]

    def as_row(b, n):  # accept PyTorch-style 1-D bias or (1, n)
        return jnp.reshape(b, (1, n)).astype(jnp.float32)

    w1 = params["w1"].astype(jnp.float32)
    w2 = params["w2"].astype(jnp.float32)
    w3 = params["w3"].astype(jnp.float32)
    b1 = as_row(params["b1"], hl_dim)
    b2 = as_row(params["b2"], hl_dim)
    b3 = as_row(params["b3"], out_dim)

    # Batch tiling derived from B: aim for >= 2 tiles (v7x: two TensorCores
    # via the "parallel" grid axis), 16-row aligned (bf16 output sublane
    # packing), capped so v5e's default scoped-VMEM limit is never a concern.
    # Ragged last tile is handled by Pallas partial blocks (no batch pad).
    tile_b = max(16, min(_round_up(pl.cdiv(B, 2), 16), tile_cap))
    n_tiles = pl.cdiv(B, tile_b)

    def resident(a):
        # Constant index_map: fetched once, stays VMEM-resident for the grid.
        # TODO(synk): pipeline_mode=pl.Buffered(1) would also drop the unused
        # second buffer (~KBs of VMEM); skipped as it buys essentially nothing.
        return pl.BlockSpec(a.shape, lambda i: (0,) * a.ndim)

    flops = 2 * B * (input_dim * hl_dim + hl_dim * hl_dim + hl_dim * out_dim)
    bytes_accessed = (
        state.size * state.dtype.itemsize
        + B * out_dim * jnp.dtype(out_dtype).itemsize
        + (w1.size + w2.size + w3.size + b1.size + b2.size + b3.size) * 4)

    return pl.pallas_call(
        _policy_kernel,
        out_shape=jax.ShapeDtypeStruct((B, out_dim), out_dtype),
        grid_spec=pltpu.PrefetchScalarGridSpec(
            num_scalar_prefetch=0,
            grid=(n_tiles,),
            in_specs=[
                pl.BlockSpec((tile_b, input_dim), lambda i: (i, 0)),  # state
                resident(w1), resident(b1),
                resident(w2), resident(b2),
                resident(w3), resident(b3),
            ],
            out_specs=pl.BlockSpec((tile_b, out_dim), lambda i: (i, 0)),
        ),
        compiler_params=pltpu.CompilerParams(
            dimension_semantics=("parallel",)),   # v7x: tiles split over 2 TCs
        cost_estimate=pl.CostEstimate(
            flops=flops, transcendentals=0, bytes_accessed=bytes_accessed),
    )(state, w1, b1, w2, b2, w3, b3)


def init_params(key, input_dim, out_dim, hl_dim):
    """Deterministic PyTorch-style (Kaiming-uniform-ish) init, pre-transposed
    weights (in, out) and 1-D biases (as nn.Linear stores them)."""
    ks = jax.random.split(key, 6)

    def linear(kw, kb, fan_in, fan_out):
        bound = 1.0 / (fan_in ** 0.5)
        w = jax.random.uniform(kw, (fan_in, fan_out), jnp.float32, -bound, bound)
        b = jax.random.uniform(kb, (fan_out,), jnp.float32, -bound, bound)
        return w, b

    w1, b1 = linear(ks[0], ks[1], input_dim, hl_dim)
    w2, b2 = linear(ks[2], ks[3], hl_dim, hl_dim)
    w3, b3 = linear(ks[4], ks[5], hl_dim, out_dim)
    return {"w1": w1, "b1": b1, "w2": w2, "b2": b2, "w3": w3, "b3": b3}


def _reference_forward_f32(state, p):
    b1 = jnp.reshape(p["b1"], (1, -1))
    b2 = jnp.reshape(p["b2"], (1, -1))
    b3 = jnp.reshape(p["b3"], (1, -1))
    h1 = jnp.maximum(state @ p["w1"] + b1, 0.0)
    h2 = jnp.maximum(h1 @ p["w2"] + b2, 0.0)
    return h2 @ p["w3"] + b3


if __name__ == "__main__":
    input_dim, out_dim, hl_dim = 16, 8, 32

    key = jax.random.PRNGKey(0)
    k_params, k_state, k_state2 = jax.random.split(key, 3)
    params = init_params(k_params, input_dim, out_dim, hl_dim)

    # Run 1: small batch, single tile.
    batch = 8
    state = jax.random.normal(k_state, (batch, input_dim), jnp.float32)
    action = jax.block_until_ready(policy_network_forward(state, params))
    assert action.shape == (batch, out_dim)
    assert action.dtype == jnp.bfloat16
    ref = _reference_forward_f32(state, params)
    assert jnp.allclose(action.astype(jnp.float32), ref, atol=2e-2, rtol=2e-2)

    # Run 2: batch not divisible by the tile -> exercises the partial-block
    # (ragged tail) path on both the input read and the masked output write,
    # and produces >= 2 grid tiles.
    batch2 = 20
    state2 = jax.random.normal(k_state2, (batch2, input_dim), jnp.float32)
    action2 = jax.block_until_ready(policy_network_forward(state2, params))
    assert action2.shape == (batch2, out_dim)
    ref2 = _reference_forward_f32(state2, params)
    assert jnp.allclose(action2.astype(jnp.float32), ref2, atol=2e-2, rtol=2e-2)

    print("KERNEL_OK")
</pallas_src>

<mosaic_0001>
module attributes {stable_mosaic.version = 11 : i64} {
  func.func @_policy_kernel(%arg0: i32, %arg1: memref<16x16xf32, #tpu.memory_space<vmem>>, %arg2: memref<16x32xf32, #tpu.memory_space<vmem>>, %arg3: memref<1x32xf32, #tpu.memory_space<vmem>>, %arg4: memref<32x32xf32, #tpu.memory_space<vmem>>, %arg5: memref<1x32xf32, #tpu.memory_space<vmem>>, %arg6: memref<32x8xf32, #tpu.memory_space<vmem>>, %arg7: memref<1x8xf32, #tpu.memory_space<vmem>>, %arg8: memref<16x8xbf16, #tpu.memory_space<vmem>>) attributes {dimension_semantics = [#tpu.dimension_semantics<parallel>], iteration_bounds = array<i64: 1>, scalar_prefetch = 0 : i64, scratch_operands = 0 : i64, tpu.core_type = #tpu.core_type<tc>, window_params = [{transform_indices = @transform_0, window_bounds = array<i64: 16, 16>}, {pipeline_mode = #tpu.pipeline_mode<synchronous>, transform_indices = @transform_1, window_bounds = array<i64: 16, 32>}, {pipeline_mode = #tpu.pipeline_mode<synchronous>, transform_indices = @transform_2, window_bounds = array<i64: 1, 32>}, {pipeline_mode = #tpu.pipeline_mode<synchronous>, transform_indices = @transform_3, window_bounds = array<i64: 32, 32>}, {pipeline_mode = #tpu.pipeline_mode<synchronous>, transform_indices = @transform_4, window_bounds = array<i64: 1, 32>}, {pipeline_mode = #tpu.pipeline_mode<synchronous>, transform_indices = @transform_5, window_bounds = array<i64: 32, 8>}, {pipeline_mode = #tpu.pipeline_mode<synchronous>, transform_indices = @transform_6, window_bounds = array<i64: 1, 8>}, {transform_indices = @transform_7, window_bounds = array<i64: 16, 8>}]} {
    %c0 = arith.constant 0 : index
    %c0_0 = arith.constant 0 : index
    %0 = vector.load %arg1[%c0, %c0_0] : memref<16x16xf32, #tpu.memory_space<vmem>>, vector<16x16xf32>
    %c0_1 = arith.constant 0 : index
    %c0_2 = arith.constant 0 : index
    %1 = vector.load %arg2[%c0_1, %c0_2] : memref<16x32xf32, #tpu.memory_space<vmem>>, vector<16x32xf32>
    %cst = arith.constant dense<0.000000e+00> : vector<16x32xf32>
    %2 = tpu.matmul %0, %1, %cst {dimension_numbers = #tpu.dot_dimension_numbers<[1], [0], [0], [1], [0, 0, 1, 1], [], []>} : vector<16x16xf32>, vector<16x32xf32>, vector<16x32xf32> -> vector<16x32xf32>
    %c0_3 = arith.constant 0 : index
    %c0_4 = arith.constant 0 : index
    %3 = vector.load %arg3[%c0_3, %c0_4] : memref<1x32xf32, #tpu.memory_space<vmem>>, vector<1x32xf32>
    %4 = vector.broadcast %3 : vector<1x32xf32> to vector<16x32xf32>
    %5 = arith.addf %2, %4 : vector<16x32xf32>
    %cst_5 = arith.constant 0.000000e+00 : f32
    %6 = vector.broadcast %cst_5 : f32 to vector<16x32xf32>
    %7 = arith.maximumf %5, %6 : vector<16x32xf32>
    %c0_6 = arith.constant 0 : index
    %c0_7 = arith.constant 0 : index
    %8 = vector.load %arg4[%c0_6, %c0_7] : memref<32x32xf32, #tpu.memory_space<vmem>>, vector<32x32xf32>
    %cst_8 = arith.constant dense<0.000000e+00> : vector<16x32xf32>
    %9 = tpu.matmul %7, %8, %cst_8 {dimension_numbers = #tpu.dot_dimension_numbers<[1], [0], [0], [1], [0, 0, 1, 1], [], []>} : vector<16x32xf32>, vector<32x32xf32>, vector<16x32xf32> -> vector<16x32xf32>
    %c0_9 = arith.constant 0 : index
    %c0_10 = arith.constant 0 : index
    %10 = vector.load %arg5[%c0_9, %c0_10] : memref<1x32xf32, #tpu.memory_space<vmem>>, vector<1x32xf32>
    %11 = vector.broadcast %10 : vector<1x32xf32> to vector<16x32xf32>
    %12 = arith.addf %9, %11 : vector<16x32xf32>
    %cst_11 = arith.constant 0.000000e+00 : f32
    %13 = vector.broadcast %cst_11 : f32 to vector<16x32xf32>
    %14 = arith.maximumf %12, %13 : vector<16x32xf32>
    %c0_12 = arith.constant 0 : index
    %c0_13 = arith.constant 0 : index
    %15 = vector.load %arg6[%c0_12, %c0_13] : memref<32x8xf32, #tpu.memory_space<vmem>>, vector<32x8xf32>
    %cst_14 = arith.constant dense<0.000000e+00> : vector<16x8xf32>
    %16 = tpu.matmul %14, %15, %cst_14 {dimension_numbers = #tpu.dot_dimension_numbers<[1], [0], [0], [1], [0, 0, 1, 1], [], []>} : vector<16x32xf32>, vector<32x8xf32>, vector<16x8xf32> -> vector<16x8xf32>
    %c0_15 = arith.constant 0 : index
    %c0_16 = arith.constant 0 : index
    %17 = vector.load %arg7[%c0_15, %c0_16] : memref<1x8xf32, #tpu.memory_space<vmem>>, vector<1x8xf32>
    %18 = vector.broadcast %17 : vector<1x8xf32> to vector<16x8xf32>
    %19 = arith.addf %16, %18 : vector<16x8xf32>
    %20 = arith.truncf %19 : vector<16x8xf32> to vector<16x8xbf16>
    %c0_17 = arith.constant 0 : index
    %c0_18 = arith.constant 0 : index
    %21 = vector.load %arg8[%c0_17, %c0_18] : memref<16x8xbf16, #tpu.memory_space<vmem>>, vector<16x8xbf16>
    tpu.vector_store %arg8[%c0_17, %c0_18], %20 {strides = array<i32>} : memref<16x8xbf16, #tpu.memory_space<vmem>>, vector<16x8xbf16>,
    return
  }
  func.func @transform_0(%arg0: i32) -> (i32, i32) {
    %c0_i32 = arith.constant 0 : i32
    %c0_i32_0 = arith.constant 0 : i32
    return %arg0, %c0_i32 : i32, i32
  }
  func.func @transform_1(%arg0: i32) -> (i32, i32) {
    %c0_i32 = arith.constant 0 : i32
    %c0_i32_0 = arith.constant 0 : i32
    %c0_i32_1 = arith.constant 0 : i32
    return %c0_i32, %c0_i32_0 : i32, i32
  }
  func.func @transform_2(%arg0: i32) -> (i32, i32) {
    %c0_i32 = arith.constant 0 : i32
    %c0_i32_0 = arith.constant 0 : i32
    %c0_i32_1 = arith.constant 0 : i32
    return %c0_i32, %c0_i32_0 : i32, i32
  }
  func.func @transform_3(%arg0: i32) -> (i32, i32) {
    %c0_i32 = arith.constant 0 : i32
    %c0_i32_0 = arith.constant 0 : i32
    %c0_i32_1 = arith.constant 0 : i32
    return %c0_i32, %c0_i32_0 : i32, i32
  }
  func.func @transform_4(%arg0: i32) -> (i32, i32) {
    %c0_i32 = arith.constant 0 : i32
    %c0_i32_0 = arith.constant 0 : i32
    %c0_i32_1 = arith.constant 0 : i32
    return %c0_i32, %c0_i32_0 : i32, i32
  }
  func.func @transform_5(%arg0: i32) -> (i32, i32) {
    %c0_i32 = arith.constant 0 : i32
    %c0_i32_0 = arith.constant 0 : i32
    %c0_i32_1 = arith.constant 0 : i32
    return %c0_i32, %c0_i32_0 : i32, i32
  }
  func.func @transform_6(%arg0: i32) -> (i32, i32) {
    %c0_i32 = arith.constant 0 : i32
    %c0_i32_0 = arith.constant 0 : i32
    %c0_i32_1 = arith.constant 0 : i32
    return %c0_i32, %c0_i32_0 : i32, i32
  }
  func.func @transform_7(%arg0: i32) -> (i32, i32) {
    %c0_i32 = arith.constant 0 : i32
    %c0_i32_0 = arith.constant 0 : i32
    return %arg0, %c0_i32 : i32, i32
  }
}

</mosaic_0001>

<llo_original>
// kernel: tpu_custom_call.1
$region0: #{tpu_custom_call.1}
  #allocation0 [shape = 'u32[]', space=smem, size = 0x4, offset = 0x4, fixed_abs, tag = 'smem constant byte address 0x4 - core index']
  #allocation1 [shape = 'u32[144,128]{1,0:T(1,128)}', space=vmem, size = 0x12000, scoped, tag = 'internal scratch']
  %s0 = inlined_call_operand.hbm [shape: f32[8,16], index: 0, kind: input, shape index: {}]
  %s1 = inlined_call_operand.vmem [shape: f32[16,32], index: 1, kind: input, shape index: {}]
  %s2 = inlined_call_operand.vmem [shape: f32[1,32], index: 2, kind: input, shape index: {}]
  %s3 = inlined_call_operand.vmem [shape: f32[32,32], index: 3, kind: input, shape index: {}]
  %s4 = inlined_call_operand.vmem [shape: f32[1,32], index: 4, kind: input, shape index: {}]
  %s5 = inlined_call_operand.vmem [shape: f32[32,8], index: 5, kind: input, shape index: {}]
  %s6 = inlined_call_operand.vmem [shape: f32[1,8], index: 6, kind: input, shape index: {}]
  %s7 = inlined_call_operand.hbm [shape: bf16[8,8], index: 7, kind: output, shape index: {}]
  %s8 = sld [smem:[#allocation0]]
  $region42: #{tpu_custom_call.1} parent=0
    _
  %s10 = ssub.s32 1, %s8
  %s11 = scalar_select 0, %s10, %s8
  $region1: #{tpu_custom_call.1} parent=0
    #allocation2 [shape = 'u8[8192]{0}', space=vmem, size = 0x2000, scoped, tag = 'input window, operand 0, single buffered']
    #allocation3 [shape = 's32[1]{0}', space=sflag, size = 0x4, scoped, tag = 'scoped memory for tpu_custom_call.1']
    #allocation4 [shape = 's32[1]{0}', space=sflag, size = 0x4, scoped, tag = 'scoped memory for tpu_custom_call.1']
    #allocation5 [shape = 'u8[4096]{0}', space=vmem, size = 0x1000, scoped, tag = 'output window, operand 0, single buffered']
    %12 = vsyncpa [#allocation3], 0
    %13 = vsyncpa [#allocation4], 0
    // Predicated region
    $region2: #{tpu_custom_call.1} parent=1 // pred_check
      _
    $region3: #{tpu_custom_call.1} parent=1 // pred_check_branch
      %15 = sbr.rel (0) target = $region5
    $region4: #{tpu_custom_call.1} parent=1 // pred_region
      %s17 = ssub.s32 256, 128
      %18 = vsyncadd [#allocation3], %s17
      %s19 = sshll.u32 [#allocation2], 4
      %s20 = int_to_ptr.vmem [resolvable:$true] %s19
      %25 = dma.hbm_to_vmem [thread:$0]  %s0, 128, %s20, [#allocation3], 128, 128, 8
    $region5: #{tpu_custom_call.1} parent=1 // pred_fallthru
      _
    // Predicated region
    $region6: #{tpu_custom_call.1} parent=1 // pred_check
      _
    $region7: #{tpu_custom_call.1} parent=1 // pred_check_branch
      %27 = sbr.rel (0) target = $region9
    $region8: #{tpu_custom_call.1} parent=1 // pred_region
      _
    $region9: #{tpu_custom_call.1} parent=1 // pred_fallthru
      _
    // Predicated region
    $region10: #{tpu_custom_call.1} parent=1 // pred_check
      _
    $region11: #{tpu_custom_call.1} parent=1 // pred_check_branch
      %29 = sbr.rel (0) target = $region13
    $region12: #{tpu_custom_call.1} parent=1 // pred_region
      _
    $region13: #{tpu_custom_call.1} parent=1 // pred_fallthru
      _
    // Predicated region
    $region14: #{tpu_custom_call.1} parent=1 // pred_check
      _
    $region15: #{tpu_custom_call.1} parent=1 // pred_check_branch
      %31 = sbr.rel (0) target = $region17
    $region16: #{tpu_custom_call.1} parent=1 // pred_region
      _
    $region17: #{tpu_custom_call.1} parent=1 // pred_fallthru
      _
    // Predicated region
    $region18: #{tpu_custom_call.1} parent=1 // pred_check
      _
    $region19: #{tpu_custom_call.1} parent=1 // pred_check_branch
      %33 = sbr.rel (0) target = $region21
    $region20: #{tpu_custom_call.1} parent=1 // pred_region
      _
    $region21: #{tpu_custom_call.1} parent=1 // pred_fallthru
      _
    // Predicated region
    $region22: #{tpu_custom_call.1} parent=1 // pred_check
      _
    $region23: #{tpu_custom_call.1} parent=1 // pred_check_branch
      %35 = sbr.rel (0) target = $region25
    $region24: #{tpu_custom_call.1} parent=1 // pred_region
      _
    $region25: #{tpu_custom_call.1} parent=1 // pred_fallthru
      _
    // Predicated region
    $region26: #{tpu_custom_call.1} parent=1 // pred_check
      _
    $region27: #{tpu_custom_call.1} parent=1 // pred_check_branch
      %37 = sbr.rel (0) target = $region29
    $region28: #{tpu_custom_call.1} parent=1 // pred_region
      _
    $region29: #{tpu_custom_call.1} parent=1 // pred_fallthru
      _
    // Predicated region
    $region30: #{tpu_custom_call.1} parent=1 // pred_check
      _
    $region31: #{tpu_custom_call.1} parent=1 // pred_check_branch
      %39 = sbr.rel (0) target = $region33
    $region32: #{tpu_custom_call.1} parent=1 // pred_region
      %40 = dma.done [#allocation3], 256
    $region33: #{tpu_custom_call.1} parent=1 // pred_fallthru
      _
    %v41 = vld [vmem:[#allocation2] sm:$0xff]
    %v42 = vld [vmem:[#allocation2 + $0x8] sm:$0xff]
    %v43 = vld [vmem:[%s1] sm:$0xff]
    %v44 = vld [vmem:[%s1 + $0x8] sm:$0xff]
    %v45 = vld [vmem:[%s2] sm:$0x1]
    %v47 = vlaneseq
    %v48 = vshrl.u32 %v47, 7
    %v49 = vsub.s32 0, %v48
    %v50 = vrot.slane %v45, %v49
    %vm52 = vcmask 130048
    %v54 = vsel %vm52, %v41, 0
    %v57 = vsel %vm52, %v42, 0
    %59 = vmatprep.subr.mxu0 0.0
    %60 = vmatpush1.msra.mxu0 %v43
    %61 = vmatprep.subr.mxu0 0.0
    %62 = vmatpush1.msra.mxu0 %v44
    %63 = vmatprep.subr.mxu0 0.0
    %64 = vmatpush1.msra.mxu0 0.0
    %65 = vmatprep.subr.mxu0 0.0
    %66 = vmatpush1.msra.mxu0 0.0
    %67 = vmatprep.subr.mxu0 0.0
    %68 = vmatpush1.msra.mxu0 0.0
    %69 = vmatprep.subr.mxu0 0.0
    %70 = vmatpush1.msra.mxu0 0.0
    %71 = vmatprep.subr.mxu0 0.0
    %72 = vmatpush1.msra.mxu0 0.0
    %73 = vmatprep.subr.mxu0 0.0
    %74 = vmatpush1.msra.mxu0 0.0
    %75 = vmatprep.subr.mxu0 0.0
    %76 = vmatpush1.msra.mxu0 0.0
    %77 = vmatprep.subr.mxu0 0.0
    %78 = vmatpush1.msra.mxu0 0.0
    %79 = vmatprep.subr.mxu0 0.0
    %80 = vmatpush1.msra.mxu0 0.0
    %81 = vmatprep.subr.mxu0 0.0
    %82 = vmatpush1.msra.mxu0 0.0
    %83 = vmatprep.subr.mxu0 0.0
    %84 = vmatpush1.msra.mxu0 0.0
    %85 = vmatprep.subr.mxu0 0.0
    %86 = vmatpush1.msra.mxu0 0.0
    %87 = vmatprep.subr.mxu0 0.0
    %88 = vmatpush1.msra.mxu0 0.0
    %89 = vmatprep.subr.mxu0 0.0
    %90 = vmatpush1.msra.mxu0 0.0
    %91 = vmatprep.subr.mxu0 0.0
    %92 = vmatpush1.msra.mxu0 0.0
    %93 = vmatprep.subr.mxu0 0.0
    %94 = vmatpush1.msra.mxu0 0.0
    %95 = vmatprep.subr.mxu0 0.0
    %96 = vmatpush1.msra.mxu0 0.0
    %97 = vmatprep.subr.mxu0 0.0
    %98 = vmatpush1.msra.mxu0 0.0
    %99 = vmatprep.subr.mxu0 0.0
    %100 = vmatpush1.msra.mxu0 0.0
    %101 = vmatprep.subr.mxu0 0.0
    %102 = vmatpush1.msra.mxu0 0.0
    %103 = vmatprep.subr.mxu0 0.0
    %104 = vmatpush1.msra.mxu0 0.0
    %105 = vmatprep.subr.mxu0 0.0
    %106 = vmatpush1.msra.mxu0 0.0
    %107 = vmatprep.subr.mxu0 0.0
    %108 = vmatpush1.msra.mxu0 0.0
    %109 = vmatprep.subr.mxu0 0.0
    %110 = vmatpush1.msra.mxu0 0.0
    %111 = vmatprep.subr.mxu0 0.0
    %112 = vmatpush1.msra.mxu0 0.0
    %113 = vmatprep.subr.mxu0 0.0
    %114 = vmatpush1.msra.mxu0 0.0
    %115 = vmatprep.subr.mxu0 0.0
    %116 = vmatpush1.msra.mxu0 0.0
    %117 = vmatprep.subr.mxu0 0.0
    %118 = vmatpush1.msra.mxu0 0.0
    %119 = vmatprep.subr.mxu0 0.0
    %120 = vmatpush1.msra.mxu0 0.0
    %121 = vmatprep.subr.mxu0 0.0
    %122 = vmatpush1.msra.mxu0 0.0
    %123 = vmatprep.mubr.f32.mxu0 0.0
    %124 = vmatmul.mubr.f32.gmra.mrb[0].mxu0 %v54
    %v125 = vpop.f32.mrb[0].mxu0
    %v126 = vadd.f32 %v50, %v125
    %v127 = vpop.f32.mrb[0].mxu0
    %128 = vmatprep.mubr.f32.mxu0 0.0
    %129 = vmatmul.mubr.f32.gmra.mrb[0].mxu0 %v57
    %v130 = vpop.f32.mrb[0].mxu0
    %v131 = vadd.f32 %v50, %v130
    %v132 = vpop.f32.mrb[0].mxu0
    %133 = vdwg.mxu0
    %v134 = vmax.f32 %v126, 0.0
    %v135 = vmax.f32 %v131, 0.0
    %v136 = vld [vmem:[%s3] sm:$0xff]
    %v137 = vld [vmem:[%s3 + $0x8] sm:$0xff]
    %v138 = vld [vmem:[%s3 + $0x10] sm:$0xff]
    %v139 = vld [vmem:[%s3 + $0x18] sm:$0xff]
    %v140 = vld [vmem:[%s4] sm:$0x1]
    %v142 = vlaneseq
    %v143 = vshrl.u32 %v142, 7
    %v144 = vsub.s32 0, %v143
    %v145 = vrot.slane %v140, %v144
    %vm147 = vcmask 261120
    %v149 = vsel %vm147, %v134, 0
    %v152 = vsel %vm147, %v135, 0
    %154 = vmatprep.subr.mxu0 0.0
    %155 = vmatpush1.msra.mxu0 %v136
    %156 = vmatprep.subr.mxu0 0.0
    %157 = vmatpush1.msra.mxu0 %v137
    %158 = vmatprep.subr.mxu0 0.0
    %159 = vmatpush1.msra.mxu0 %v138
    %160 = vmatprep.subr.mxu0 0.0
    %161 = vmatpush1.msra.mxu0 %v139
    %162 = vmatprep.subr.mxu0 0.0
    %163 = vmatpush1.msra.mxu0 0.0
    %164 = vmatprep.subr.mxu0 0.0
    %165 = vmatpush1.msra.mxu0 0.0
    %166 = vmatprep.subr.mxu0 0.0
    %167 = vmatpush1.msra.mxu0 0.0
    %168 = vmatprep.subr.mxu0 0.0
    %169 = vmatpush1.msra.mxu0 0.0
    %170 = vmatprep.subr.mxu0 0.0
    %171 = vmatpush1.msra.mxu0 0.0
    %172 = vmatprep.subr.mxu0 0.0
    %173 = vmatpush1.msra.mxu0 0.0
    %174 = vmatprep.subr.mxu0 0.0
    %175 = vmatpush1.msra.mxu0 0.0
    %176 = vmatprep.subr.mxu0 0.0
    %177 = vmatpush1.msra.mxu0 0.0
    %178 = vmatprep.subr.mxu0 0.0
    %179 = vmatpush1.msra.mxu0 0.0
    %180 = vmatprep.subr.mxu0 0.0
    %181 = vmatpush1.msra.mxu0 0.0
    %182 = vmatprep.subr.mxu0 0.0
    %183 = vmatpush1.msra.mxu0 0.0
    %184 = vmatprep.subr.mxu0 0.0
    %185 = vmatpush1.msra.mxu0 0.0
    %186 = vmatprep.subr.mxu0 0.0
    %187 = vmatpush1.msra.mxu0 0.0
    %188 = vmatprep.subr.mxu0 0.0
    %189 = vmatpush1.msra.mxu0 0.0
    %190 = vmatprep.subr.mxu0 0.0
    %191 = vmatpush1.msra.mxu0 0.0
    %192 = vmatprep.subr.mxu0 0.0
    %193 = vmatpush1.msra.mxu0 0.0
    %194 = vmatprep.subr.mxu0 0.0
    %195 = vmatpush1.msra.mxu0 0.0
    %196 = vmatprep.subr.mxu0 0.0
    %197 = vmatpush1.msra.mxu0 0.0
    %198 = vmatprep.subr.mxu0 0.0
    %199 = vmatpush1.msra.mxu0 0.0
    %200 = vmatprep.subr.mxu0 0.0
    %201 = vmatpush1.msra.mxu0 0.0
    %202 = vmatprep.subr.mxu0 0.0
    %203 = vmatpush1.msra.mxu0 0.0
    %204 = vmatprep.subr.mxu0 0.0
    %205 = vmatpush1.msra.mxu0 0.0
    %206 = vmatprep.subr.mxu0 0.0
    %207 = vmatpush1.msra.mxu0 0.0
    %208 = vmatprep.subr.mxu0 0.0
    %209 = vmatpush1.msra.mxu0 0.0
    %210 = vmatprep.subr.mxu0 0.0
    %211 = vmatpush1.msra.mxu0 0.0
    %212 = vmatprep.subr.mxu0 0.0
    %213 = vmatpush1.msra.mxu0 0.0
    %214 = vmatprep.subr.mxu0 0.0
    %215 = vmatpush1.msra.mxu0 0.0
    %216 = vmatprep.subr.mxu0 0.0
    %217 = vmatpush1.msra.mxu0 0.0
    %218 = vmatprep.mubr.f32.mxu0 0.0
    %219 = vmatmul.mubr.f32.gmra.mrb[0].mxu0 %v149
    %v220 = vpop.f32.mrb[0].mxu0
    %v221 = vadd.f32 %v145, %v220
    %v222 = vpop.f32.mrb[0].mxu0
    %223 = vmatprep.mubr.f32.mxu0 0.0
    %224 = vmatmul.mubr.f32.gmra.mrb[0].mxu0 %v152
    %v225 = vpop.f32.mrb[0].mxu0
    %v226 = vadd.f32 %v145, %v225
    %v227 = vpop.f32.mrb[0].mxu0
    %228 = vdwg.mxu0
    %v229 = vmax.f32 %v221, 0.0
    %v230 = vmax.f32 %v226, 0.0
    %v231 = vld [vmem:[%s5] sm:$0xff]
    %v232 = vld [vmem:[%s5 + $0x8] sm:$0xff]
    %v233 = vld [vmem:[%s5 + $0x10] sm:$0xff]
    %v234 = vld [vmem:[%s5 + $0x18] sm:$0xff]
    %v235 = vld [vmem:[%s6] sm:$0x1]
    %v237 = vlaneseq
    %v238 = vshrl.u32 %v237, 7
    %v239 = vsub.s32 0, %v238
    %v240 = vrot.slane %v235, %v239
    %v243 = vsel %vm147, %v229, 0
    %v246 = vsel %vm147, %v230, 0
    %248 = vmatprep.subr.mxu0 0.0
    %249 = vmatpush1.msra.mxu0 %v231
    %250 = vmatprep.subr.mxu0 0.0
    %251 = vmatpush1.msra.mxu0 %v232
    %252 = vmatprep.subr.mxu0 0.0
    %253 = vmatpush1.msra.mxu0 %v233
    %254 = vmatprep.subr.mxu0 0.0
    %255 = vmatpush1.msra.mxu0 %v234
    %256 = vmatprep.subr.mxu0 0.0
    %257 = vmatpush1.msra.mxu0 0.0
    %258 = vmatprep.subr.mxu0 0.0
    %259 = vmatpush1.msra.mxu0 0.0
    %260 = vmatprep.subr.mxu0 0.0
    %261 = vmatpush1.msra.mxu0 0.0
    %262 = vmatprep.subr.mxu0 0.0
    %263 = vmatpush1.msra.mxu0 0.0
    %264 = vmatprep.subr.mxu0 0.0
    %265 = vmatpush1.msra.mxu0 0.0
    %266 = vmatprep.subr.mxu0 0.0
    %267 = vmatpush1.msra.mxu0 0.0
    %268 = vmatprep.subr.mxu0 0.0
    %269 = vmatpush1.msra.mxu0 0.0
    %270 = vmatprep.subr.mxu0 0.0
    %271 = vmatpush1.msra.mxu0 0.0
    %272 = vmatprep.subr.mxu0 0.0
    %273 = vmatpush1.msra.mxu0 0.0
    %274 = vmatprep.subr.mxu0 0.0
    %275 = vmatpush1.msra.mxu0 0.0
    %276 = vmatprep.subr.mxu0 0.0
    %277 = vmatpush1.msra.mxu0 0.0
    %278 = vmatprep.subr.mxu0 0.0
    %279 = vmatpush1.msra.mxu0 0.0
    %280 = vmatprep.subr.mxu0 0.0
    %281 = vmatpush1.msra.mxu0 0.0
    %282 = vmatprep.subr.mxu0 0.0
    %283 = vmatpush1.msra.mxu0 0.0
    %284 = vmatprep.subr.mxu0 0.0
    %285 = vmatpush1.msra.mxu0 0.0
    %286 = vmatprep.subr.mxu0 0.0
    %287 = vmatpush1.msra.mxu0 0.0
    %288 = vmatprep.subr.mxu0 0.0
    %289 = vmatpush1.msra.mxu0 0.0
    %290 = vmatprep.subr.mxu0 0.0
    %291 = vmatpush1.msra.mxu0 0.0
    %292 = vmatprep.subr.mxu0 0.0
    %293 = vmatpush1.msra.mxu0 0.0
    %294 = vmatprep.subr.mxu0 0.0
    %295 = vmatpush1.msra.mxu0 0.0
    %296 = vmatprep.subr.mxu0 0.0
    %297 = vmatpush1.msra.mxu0 0.0
    %298 = vmatprep.subr.mxu0 0.0
    %299 = vmatpush1.msra.mxu0 0.0
    %300 = vmatprep.subr.mxu0 0.0
    %301 = vmatpush1.msra.mxu0 0.0
    %302 = vmatprep.subr.mxu0 0.0
    %303 = vmatpush1.msra.mxu0 0.0
    %304 = vmatprep.subr.mxu0 0.0
    %305 = vmatpush1.msra.mxu0 0.0
    %306 = vmatprep.subr.mxu0 0.0
    %307 = vmatpush1.msra.mxu0 0.0
    %308 = vmatprep.subr.mxu0 0.0
    %309 = vmatpush1.msra.mxu0 0.0
    %310 = vmatprep.subr.mxu0 0.0
    %311 = vmatpush1.msra.mxu0 0.0
    %312 = vmatprep.mubr.f32.mxu0 0.0
    %313 = vmatmul.mubr.f32.gmra.mrb[0].mxu0 %v243
    %v314 = vpop.f32.mrb[0].mxu0
    %v315 = vadd.f32 %v240, %v314
    %v316 = vpop.f32.mrb[0].mxu0
    %317 = vmatprep.mubr.f32.mxu0 0.0
    %318 = vmatmul.mubr.f32.gmra.mrb[0].mxu0 %v246
    %v319 = vpop.f32.mrb[0].mxu0
    %v320 = vadd.f32 %v240, %v319
    %v321 = vpop.f32.mrb[0].mxu0
    %322 = vdwg.mxu0
    %v323 = vpack.c.bf16 %v320, %v315
    %v325 = vunpack.c.l.b16 %v323
    %v326 = vunpack.c.h.b16 %v323
    %v327 = vpack.c.b16 %v325, %v325
    %v328 = vpack.c.b16 %v326, %v326
    %vm331 = vcmask 60416
    %332 = vst.msk [vmem:[#allocation5] sm:$0xf] %vm331, %v327
    %333 = vst.msk [vmem:[#allocation5 + $0x4] sm:$0xf] %vm331, %v328
    // Predicated region
    $region34: #{tpu_custom_call.1} parent=1 // pred_check
      _
    $region35: #{tpu_custom_call.1} parent=1 // pred_check_branch
      %335 = sbr.rel (0) target = $region37
    $region36: #{tpu_custom_call.1} parent=1 // pred_region
      %s337 = ssub.s32 128, 64
      %338 = vsyncadd [#allocation4], %s337
      %s339 = sshll.u32 [#allocation5], 4
      %s340 = int_to_ptr.vmem [resolvable:$true] %s339
      %345 = dma.vmem_to_hbm [thread:$0]  %s340, 64, %s7, [#allocation4], 64, 64, 4
    $region37: #{tpu_custom_call.1} parent=1 // pred_fallthru
      _
    // Predicated region
    $region38: #{tpu_custom_call.1} parent=1 // pred_check
      _
    $region39: #{tpu_custom_call.1} parent=1 // pred_check_branch
      %347 = sbr.rel (0) target = $region41
    $region40: #{tpu_custom_call.1} parent=1 // pred_region
      %348 = dma.done [#allocation4], 128
    $region41: #{tpu_custom_call.1} parent=1 // pred_fallthru
      _
    %349 = vsyncpa [#allocation3], 1
    %350 = vsyncpa [#allocation4], 1

</llo_original>
